<compile_context>
chip_gen: v7x
topology: tpu7x:2x2x1
jax: 0.10.0
libtpu: 0.0.40
codegen_flags: <defaults>
</compile_context>

<pallas_src>
import functools

import jax
import jax.numpy as jnp
from jax.experimental import pallas as pl
from jax.experimental.pallas import tpu as pltpu


def _attention_kernel(x_ref, wqkv_ref, wp_ref, b_ref, hmask_ref, o_ref,
                      *, num_heads, c_pad, scale, compute_dtype):
    H = num_heads
    Cp = c_pad
    f32 = jnp.float32
    cdt = compute_dtype

    x = x_ref[0].astype(cdt)                                     # (N, Cp)

    # ---- Fused QKV projection: one lane-dense matmul ----
    qkv = jnp.dot(x, wqkv_ref[...], preferred_element_type=f32)  # (N, 3*Cp)

    # Fold the softmax scale into q (N*Cp elements, not N*H*N scores).
    qs = (qkv[:, :Cp] * scale).astype(cdt)                       # (N, Cp)
    kv = qkv[:, Cp:].astype(cdt)                                 # (N, 2*Cp) = [k | v]

    # Sublane-tile k,v H times into the token slab (H*N, Cp) and apply the
    # per-head block mask (channel column c only talks to head c // D).
    kv_t = jnp.concatenate([kv] * H, axis=0)                     # (H*N, 2*Cp)
    hmask = hmask_ref[...]                                       # (H*N, Cp) 0/1
    km = kv_t[:, :Cp] * hmask                                    # masked K rows
    vm = kv_t[:, Cp:] * hmask                                    # masked V rows

    # ---- Scores for all heads in one full-width contraction ----
    # s[i, h*N + j] = scale * <q_h[i], k_h[j]>
    s = jnp.einsum('nc,rc->nr', qs, km, preferred_element_type=f32)  # (N, H*N)

    # Per-head softmax.  Global row max is a valid shift (cancels between
    # numerator and denominator) and keeps the reduction full-lane; all
    # elementwise softmax math stays in f32.
    s = s - jnp.max(s, axis=-1, keepdims=True)
    p = jnp.exp(s)                                               # (N, H*N) f32
    pb = p.astype(cdt)

    # ctx numerator and per-head denominators via two lane-dense matmuls.
    # hmask is 1 in padded channel columns, so denom > 0 there (no 0*inf NaN);
    # vm is exactly 0 there, so padded ctx columns come out as exact zeros.
    ctx_un = jnp.dot(pb, vm, preferred_element_type=f32)         # (N, Cp)
    denom = jnp.dot(pb, hmask, preferred_element_type=f32)       # (N, Cp)
    ctx = ctx_un * pl.reciprocal(denom, approx=True)             # (N, Cp)

    # ---- Output projection: single matmul over heads*head_dim + bias ----
    y = jnp.dot(ctx.astype(cdt), wp_ref[...], preferred_element_type=f32)
    o_ref[0] = (y + b_ref[...]).astype(o_ref.dtype)


def attention_pallas(x, w_qkv, w_proj, b_proj, num_heads, *,
                     compute_dtype=jnp.bfloat16):
    """x: (B, N, C) f32; w_qkv: (C, 3C); w_proj: (C, C); b_proj: (1, C).

    Weights are stored already transposed (in_features, out_features), i.e.
    y = x @ W, matching the reference below and the PyTorch forward.
    Use compute_dtype=jnp.float32 for the f32-operand variant (v5e).
    """
    B, N, C = x.shape
    H = num_heads
    D = C // H
    scale = D ** (-0.5)

    LANE = 128
    Cp = ((C + LANE - 1) // LANE) * LANE
    f32 = jnp.float32
    cdt = compute_dtype

    # Lane-dense zero padding of the channel axis (exact results; sliced off).
    x_p = jnp.pad(x, ((0, 0), (0, 0), (0, Cp - C)))

    # Fused QKV weight, packed so q / k / v outputs each start at a 128-lane
    # boundary (slicing the matmul result is then a free vreg slice).
    wqkv_p = jnp.zeros((Cp, 3 * Cp), f32)
    wqkv_p = wqkv_p.at[:C, 0 * Cp:0 * Cp + C].set(w_qkv[:, 0 * C:1 * C])
    wqkv_p = wqkv_p.at[:C, 1 * Cp:1 * Cp + C].set(w_qkv[:, 1 * C:2 * C])
    wqkv_p = wqkv_p.at[:C, 2 * Cp:2 * Cp + C].set(w_qkv[:, 2 * C:3 * C])
    wqkv_p = wqkv_p.astype(cdt)

    # Output projection weight / bias, lane-dense padded.
    wp_p = jnp.zeros((Cp, Cp), f32).at[:C, :C].set(w_proj).astype(cdt)
    bp_p = jnp.pad(b_proj, ((0, 0), (0, Cp - C))).astype(f32)

    # Per-head block mask over the (H*N token-slab, Cp channel) plane:
    # 1 where channel column c belongs to the slab row's head (c//D == r//N),
    # plus 1 in the padded channel columns (keeps softmax denominators > 0).
    r_head = (jnp.arange(H * N) // N)[:, None]                   # (H*N, 1)
    col = jnp.arange(Cp)[None, :]                                # (1, Cp)
    hmask = ((r_head == (col // D)) | (col >= C)).astype(cdt)    # (H*N, Cp)

    kernel = functools.partial(_attention_kernel, num_heads=H, c_pad=Cp,
                               scale=scale, compute_dtype=cdt)

    out_p = pl.pallas_call(
        kernel,
        out_shape=jax.ShapeDtypeStruct((B, N, Cp), f32),
        grid_spec=pltpu.PrefetchScalarGridSpec(
            num_scalar_prefetch=0,
            grid=(B,),
            in_specs=[
                pl.BlockSpec((1, N, Cp), lambda b: (b, 0, 0)),    # x (per batch)
                pl.BlockSpec((Cp, 3 * Cp), lambda b: (0, 0)),     # W_qkv (resident)
                pl.BlockSpec((Cp, Cp), lambda b: (0, 0)),         # W_proj (resident)
                pl.BlockSpec((1, Cp), lambda b: (0, 0)),          # bias (resident)
                pl.BlockSpec((H * N, Cp), lambda b: (0, 0)),      # head mask (resident)
            ],
            out_specs=pl.BlockSpec((1, N, Cp), lambda b: (b, 0, 0)),
        ),
        compiler_params=pltpu.CompilerParams(
            dimension_semantics=("parallel",)),
    )(x_p, wqkv_p, wp_p, bp_p, hmask)

    return out_p[:, :, :C]


def attention_reference(x, w_qkv, w_proj, b_proj, num_heads):
    """Plain-JAX (f32) reference mirroring the PyTorch forward."""
    B, N, C = x.shape
    D = C // num_heads
    scale = D ** (-0.5)
    qkv = jnp.einsum("bnc,cd->bnd", x, w_qkv)                    # (B, N, 3C)
    qkv = qkv.reshape(B, N, 3, num_heads, D).transpose(2, 0, 3, 1, 4)
    q, k, v = qkv[0], qkv[1], qkv[2]                             # (B, H, N, D)
    attn = jnp.einsum("bhnd,bhmd->bhnm", q, k) * scale
    attn = jax.nn.softmax(attn, axis=-1)
    ctx = jnp.einsum("bhnm,bhmd->bhnd", attn, v)                 # (B, H, N, D)
    ctx = ctx.transpose(0, 2, 1, 3).reshape(B, N, C)
    return jnp.einsum("bnc,cd->bnd", ctx, w_proj) + b_proj[0]


if __name__ == "__main__":
    # Shapes consistent with the module: dim=32, num_heads=8 -> head_dim=4.
    B, N, C, H = 2, 16, 32, 8

    key = jax.random.PRNGKey(0)
    kx, kw1, kw2, kb = jax.random.split(key, 4)

    x = jax.random.normal(kx, (B, N, C), dtype=jnp.float32)
    w_qkv = jax.random.normal(kw1, (C, 3 * C), dtype=jnp.float32) * 0.05
    w_proj = jax.random.normal(kw2, (C, C), dtype=jnp.float32) * 0.05
    b_proj = jax.random.normal(kb, (1, C), dtype=jnp.float32) * 0.05

    out = attention_pallas(x, w_qkv, w_proj, b_proj, H)
    out = jax.block_until_ready(out)

    ref = attention_reference(x, w_qkv, w_proj, b_proj, H)
    assert out.shape == (B, N, C)
    # bf16 MXU operands / f32 accumulation + approx reciprocal -> tolerance
    # loosened relative to a pure-f32 kernel.
    assert jnp.allclose(out, ref, atol=2e-2, rtol=2e-2), "mismatch vs reference"

    print("KERNEL_OK")
</pallas_src>

<mosaic_0001>
module attributes {stable_mosaic.version = 11 : i64} {
  func.func @_attention_kernel(%arg0: i32, %arg1: memref<1x16x128xf32, #tpu.memory_space<vmem>>, %arg2: memref<128x384xbf16, #tpu.memory_space<vmem>>, %arg3: memref<128x128xbf16, #tpu.memory_space<vmem>>, %arg4: memref<1x128xf32, #tpu.memory_space<vmem>>, %arg5: memref<128x128xbf16, #tpu.memory_space<vmem>>, %arg6: memref<1x16x128xf32, #tpu.memory_space<vmem>>) attributes {dimension_semantics = [#tpu.dimension_semantics<parallel>], iteration_bounds = array<i64: 2>, scalar_prefetch = 0 : i64, scratch_operands = 0 : i64, tpu.core_type = #tpu.core_type<tc>, window_params = [{transform_indices = @transform_0, window_bounds = array<i64: 1, 16, 128>}, {pipeline_mode = #tpu.pipeline_mode<synchronous>, transform_indices = @transform_1, window_bounds = array<i64: 128, 384>}, {pipeline_mode = #tpu.pipeline_mode<synchronous>, transform_indices = @transform_2, window_bounds = array<i64: 128, 128>}, {pipeline_mode = #tpu.pipeline_mode<synchronous>, transform_indices = @transform_3, window_bounds = array<i64: 1, 128>}, {pipeline_mode = #tpu.pipeline_mode<synchronous>, transform_indices = @transform_4, window_bounds = array<i64: 128, 128>}, {transform_indices = @transform_5, window_bounds = array<i64: 1, 16, 128>}]} {
    %c0 = arith.constant 0 : index
    %c0_0 = arith.constant 0 : index
    %c0_1 = arith.constant 0 : index
    %0 = vector.load %arg1[%c0, %c0_0, %c0_1] : memref<1x16x128xf32, #tpu.memory_space<vmem>>, vector<1x16x128xf32>
    %1 = vector.shape_cast %0 : vector<1x16x128xf32> to vector<16x128xf32>
    %2 = arith.truncf %1 : vector<16x128xf32> to vector<16x128xbf16>
    %c0_2 = arith.constant 0 : index
    %c0_3 = arith.constant 0 : index
    %3 = vector.load %arg2[%c0_2, %c0_3] : memref<128x384xbf16, #tpu.memory_space<vmem>>, vector<128x384xbf16>
    %cst = arith.constant dense<0.000000e+00> : vector<16x384xf32>
    %4 = tpu.matmul %2, %3, %cst {dimension_numbers = #tpu.dot_dimension_numbers<[1], [0], [0], [1], [0, 0, 1, 1], [], []>} : vector<16x128xbf16>, vector<128x384xbf16>, vector<16x384xf32> -> vector<16x384xf32>
    %5 = vector.extract_strided_slice %4 {offsets = [0, 0], sizes = [16, 128], strides = [1, 1]} : vector<16x384xf32> to vector<16x128xf32>
    %cst_4 = arith.constant 5.000000e-01 : f32
    %6 = vector.broadcast %cst_4 : f32 to vector<16x128xf32>
    %7 = arith.mulf %5, %6 : vector<16x128xf32>
    %8 = arith.truncf %7 : vector<16x128xf32> to vector<16x128xbf16>
    %9 = vector.extract_strided_slice %4 {offsets = [0, 128], sizes = [16, 256], strides = [1, 1]} : vector<16x384xf32> to vector<16x256xf32>
    %10 = arith.truncf %9 : vector<16x256xf32> to vector<16x256xbf16>
    %11 = tpu.concatenate %10, %10, %10, %10, %10, %10, %10, %10 in 0 : vector<16x256xbf16>, vector<16x256xbf16>, vector<16x256xbf16>, vector<16x256xbf16>, vector<16x256xbf16>, vector<16x256xbf16>, vector<16x256xbf16>, vector<16x256xbf16> -> vector<128x256xbf16>
    %c0_5 = arith.constant 0 : index
    %c0_6 = arith.constant 0 : index
    %12 = vector.load %arg5[%c0_5, %c0_6] : memref<128x128xbf16, #tpu.memory_space<vmem>>, vector<128x128xbf16>
    %13 = vector.extract_strided_slice %11 {offsets = [0, 0], sizes = [128, 128], strides = [1, 1]} : vector<128x256xbf16> to vector<128x128xbf16>
    %14 = arith.mulf %13, %12 : vector<128x128xbf16>
    %15 = vector.extract_strided_slice %11 {offsets = [0, 128], sizes = [128, 128], strides = [1, 1]} : vector<128x256xbf16> to vector<128x128xbf16>
    %16 = arith.mulf %15, %12 : vector<128x128xbf16>
    "tpu.trace_start"() <{level = 10 : i32, message = "nc,rc->nr"}> : () -> ()
    %cst_7 = arith.constant dense<0.000000e+00> : vector<16x128xf32>
    %17 = tpu.matmul %8, %14, %cst_7 {dimension_numbers = #tpu.dot_dimension_numbers<[1], [1], [0], [0], [0, 0, 1, 0], [], []>} : vector<16x128xbf16>, vector<128x128xbf16>, vector<16x128xf32> -> vector<16x128xf32>
    "tpu.trace_stop"() : () -> ()
    %cst_8 = arith.constant dense<0xFF800000> : vector<16xf32>
    %18 = vector.multi_reduction <maximumf>, %17, %cst_8 [1] : vector<16x128xf32> to vector<16xf32>
    %19 = vector.shape_cast %18 : vector<16xf32> to vector<16x1xf32>
    %20 = vector.broadcast %19 : vector<16x1xf32> to vector<16x128xf32>
    %21 = arith.subf %17, %20 : vector<16x128xf32>
    %22 = math.exp %21 : vector<16x128xf32>
    %23 = arith.truncf %22 : vector<16x128xf32> to vector<16x128xbf16>
    %cst_9 = arith.constant dense<0.000000e+00> : vector<16x128xf32>
    %24 = tpu.matmul %23, %16, %cst_9 {dimension_numbers = #tpu.dot_dimension_numbers<[1], [0], [0], [1], [0, 0, 1, 1], [], []>} : vector<16x128xbf16>, vector<128x128xbf16>, vector<16x128xf32> -> vector<16x128xf32>
    %cst_10 = arith.constant dense<0.000000e+00> : vector<16x128xf32>
    %25 = tpu.matmul %23, %12, %cst_10 {dimension_numbers = #tpu.dot_dimension_numbers<[1], [0], [0], [1], [0, 0, 1, 1], [], []>} : vector<16x128xbf16>, vector<128x128xbf16>, vector<16x128xf32> -> vector<16x128xf32>
    %26 = tpu.reciprocal %25 {approx = true} : vector<16x128xf32> -> vector<16x128xf32>
    %27 = arith.mulf %24, %26 : vector<16x128xf32>
    %28 = arith.truncf %27 : vector<16x128xf32> to vector<16x128xbf16>
    %c0_11 = arith.constant 0 : index
    %c0_12 = arith.constant 0 : index
    %29 = vector.load %arg3[%c0_11, %c0_12] : memref<128x128xbf16, #tpu.memory_space<vmem>>, vector<128x128xbf16>
    %cst_13 = arith.constant dense<0.000000e+00> : vector<16x128xf32>
    %30 = tpu.matmul %28, %29, %cst_13 {dimension_numbers = #tpu.dot_dimension_numbers<[1], [0], [0], [1], [0, 0, 1, 1], [], []>} : vector<16x128xbf16>, vector<128x128xbf16>, vector<16x128xf32> -> vector<16x128xf32>
    %c0_14 = arith.constant 0 : index
    %c0_15 = arith.constant 0 : index
    %31 = vector.load %arg4[%c0_14, %c0_15] : memref<1x128xf32, #tpu.memory_space<vmem>>, vector<1x128xf32>
    %32 = vector.broadcast %31 : vector<1x128xf32> to vector<16x128xf32>
    %33 = arith.addf %30, %32 : vector<16x128xf32>
    %c0_16 = arith.constant 0 : index
    %c0_17 = arith.constant 0 : index
    %c0_18 = arith.constant 0 : index
    %34 = vector.load %arg6[%c0_16, %c0_17, %c0_18] : memref<1x16x128xf32, #tpu.memory_space<vmem>>, vector<1x16x128xf32>
    %35 = vector.shape_cast %34 : vector<1x16x128xf32> to vector<16x128xf32>
    %36 = vector.shape_cast %33 : vector<16x128xf32> to vector<1x16x128xf32>
    tpu.vector_store %arg6[%c0_16, %c0_17, %c0_18], %36 {strides = array<i32>} : memref<1x16x128xf32, #tpu.memory_space<vmem>>, vector<1x16x128xf32>,
    return
  }
  func.func @transform_0(%arg0: i32) -> (i32, i32, i32) {
    %c0_i32 = arith.constant 0 : i32
    %c0_i32_0 = arith.constant 0 : i32
    %c0_i32_1 = arith.constant 0 : i32
    return %arg0, %c0_i32, %c0_i32_0 : i32, i32, i32
  }
  func.func @transform_1(%arg0: i32) -> (i32, i32) {
    %c0_i32 = arith.constant 0 : i32
    %c0_i32_0 = arith.constant 0 : i32
    %c0_i32_1 = arith.constant 0 : i32
    return %c0_i32, %c0_i32_0 : i32, i32
  }
  func.func @transform_2(%arg0: i32) -> (i32, i32) {
    %c0_i32 = arith.constant 0 : i32
    %c0_i32_0 = arith.constant 0 : i32
    %c0_i32_1 = arith.constant 0 : i32
    return %c0_i32, %c0_i32_0 : i32, i32
  }
  func.func @transform_3(%arg0: i32) -> (i32, i32) {
    %c0_i32 = arith.constant 0 : i32
    %c0_i32_0 = arith.constant 0 : i32
    %c0_i32_1 = arith.constant 0 : i32
    return %c0_i32, %c0_i32_0 : i32, i32
  }
  func.func @transform_4(%arg0: i32) -> (i32, i32) {
    %c0_i32 = arith.constant 0 : i32
    %c0_i32_0 = arith.constant 0 : i32
    %c0_i32_1 = arith.constant 0 : i32
    return %c0_i32, %c0_i32_0 : i32, i32
  }
  func.func @transform_5(%arg0: i32) -> (i32, i32, i32) {
    %c0_i32 = arith.constant 0 : i32
    %c0_i32_0 = arith.constant 0 : i32
    %c0_i32_1 = arith.constant 0 : i32
    return %arg0, %c0_i32, %c0_i32_0 : i32, i32, i32
  }
}

</mosaic_0001>

<llo_original>
// kernel: tpu_custom_call.1
$region0: #{tpu_custom_call.1}
  #allocation0 [shape = 'u32[]', space=smem, size = 0x4, offset = 0x4, fixed_abs, tag = 'smem constant byte address 0x4 - core index']
  #allocation1 [shape = 'u32[144,128]{1,0:T(1,128)}', space=vmem, size = 0x12000, scoped, tag = 'internal scratch']
  %s0 = inlined_call_operand.hbm [shape: f32[2,16,128], index: 0, kind: input, shape index: {}]
  %s1 = inlined_call_operand.hbm [shape: bf16[128,384], index: 1, kind: input, shape index: {}]
  %s2 = inlined_call_operand.hbm [shape: bf16[128,128], index: 2, kind: input, shape index: {}]
  %s3 = inlined_call_operand.vmem [shape: f32[1,128], index: 3, kind: input, shape index: {}]
  %s4 = inlined_call_operand.hbm [shape: bf16[128,128], index: 4, kind: input, shape index: {}]
  %s5 = inlined_call_operand.hbm [shape: f32[2,16,128], index: 5, kind: output, shape index: {}]
  %s6 = sld [smem:[#allocation0]]
  $region69: #{tpu_custom_call.1} parent=0
    _
  %s8 = ssub.s32 1, %s6
  %s9 = scalar_select 0, %s8, %s6
  $region1: #{tpu_custom_call.1} parent=0
    #allocation2 [shape = 'u8[16384]{0}', space=vmem, size = 0x4000, scoped, tag = 'input window, operand 0']
    #allocation3 [shape = 's32[2]{0}', space=sflag, size = 0x8, scoped, tag = 'scoped memory for tpu_custom_call.1']
    #allocation4 [shape = 's32[2]{0}', space=sflag, size = 0x8, scoped, tag = 'scoped memory for tpu_custom_call.1']
    #allocation5 [shape = 'u8[98304]{0}', space=vmem, size = 0x18000, scoped, tag = 'input window, operand 1, single buffered']
    #allocation6 [shape = 's32[1]{0}', space=sflag, size = 0x4, scoped, tag = 'scoped memory for tpu_custom_call.1']
    #allocation7 [shape = 'u8[32768]{0}', space=vmem, size = 0x8000, scoped, tag = 'input window, operand 2, single buffered']
    #allocation8 [shape = 'u8[32768]{0}', space=vmem, size = 0x8000, scoped, tag = 'input window, operand 4, single buffered']
    #allocation9 [shape = 's32[1]{0}', space=sflag, size = 0x4, scoped, tag = 'scoped memory for tpu_custom_call.1']
    #allocation10 [shape = 'u8[16384]{0}', space=vmem, size = 0x4000, scoped, tag = 'output window, operand 0']
    %10 = vsyncpa [#allocation3], 0
    %s11 = scalar_lea.sflag [#allocation3], 1
    %12 = vsyncpa %s11, 0
    %13 = vsyncpa [#allocation6], 0
    %14 = vsyncpa [#allocation9], 0
    %15 = vsyncpa [#allocation4], 0
    %s16 = scalar_lea.sflag [#allocation4], 1
    %17 = vsyncpa %s16, 0
    loop: start=0, step=1, limit=4
    $region2: #{tpu_custom_call.1} parent=1 // loop_pre_header
      _
    $region3: #{tpu_custom_call.1} parent=1 // loop_header
      %s19 = sphi 0, %s23
      %p20 = scmp.ge.s32.totalorder %s19, 4
      %s29 = sphi 0, %s31
      %s32 = sphi 0, %s29
      %s33 = sphi 0, %s32
      %s49 = sphi 0, %s33
      %s53 = sphi 0, %s53
      %s55 = sphi 0, %s53
      %s56 = sphi 0, %s55
      %s70 = sphi 0, %s56
      %s74 = sphi 0, %s74
      %s76 = sphi 0, %s74
      %s77 = sphi 0, %s76
      %s91 = sphi 0, %s77
      %s95 = sphi 0, %s95
      %s97 = sphi 0, %s95
      %s98 = sphi 0, %s97
      %s112 = sphi 0, %s98
      %s116 = sphi 0, %s116
      %s118 = sphi 0, %s116
      %s119 = sphi 0, %s118
      %s133 = sphi 0, %s119
      %s139 = sphi 0, %s141
      %s142 = sphi 0, %s139
      %s143 = sphi 0, %s142
      %s159 = sphi 0, %s143
    $region4: #{tpu_custom_call.1} parent=1 // loop_header_branch
      %22 = sbr.rel (%p20) target = $region8
    $region5: #{tpu_custom_call.1} parent=1 // loop_body
      %s24 = ssub.s32 %s19, 1
      %s25 = ssub.s32 %s19, 2
      %s26 = sadd.s32 %s19, 1
      %s27 = ssub.s32 %s19, %s26
      %p28 = scmp.eq.s32.totalorder %s27, 0
      %s30 = sadd.s32 %s29, 1
      %s31 = scalar_select %p28, %s29, %s30
      %p34 = pneg %p28
      %p35 = scmp.eq.s32.totalorder %s19, 1
      %p36 = por %p34, %p35
      %p37 = scmp.ne.s32.totalorder %s29, %s32
      %p38 = scmp.eq.s32.totalorder %s19, 0
      %p39 = por %p37, %p38
      %p40 = scmp.ne.s32.totalorder %s29, %s32
      %p41 = scmp.eq.s32.totalorder %s24, 1
      %p42 = por %p40, %p41
      %p43 = scmp.ne.s32.totalorder %s32, %s33
      %p44 = scmp.eq.s32.totalorder %s24, 0
      %p45 = por %p43, %p44
      %p46 = scmp.ne.s32.totalorder %s32, %s33
      %p47 = scmp.eq.s32.totalorder %s25, 1
      %p48 = por %p46, %p47
      %p50 = scmp.ne.s32.totalorder %s33, %s49
      %p51 = scmp.eq.s32.totalorder %s25, 0
      %p52 = por %p50, %p51
      %s54 = sadd.s32 %s53, 1
      %p57 = scmp.eq.s32.totalorder %s19, 1
      %p58 = scmp.ne.s32.totalorder %s53, %s55
      %p59 = scmp.eq.s32.totalorder %s19, 0
      %p60 = por %p58, %p59
      %p61 = scmp.ne.s32.totalorder %s53, %s55
      %p62 = scmp.eq.s32.totalorder %s24, 1
      %p63 = por %p61, %p62
      %p64 = scmp.ne.s32.totalorder %s55, %s56
      %p65 = scmp.eq.s32.totalorder %s24, 0
      %p66 = por %p64, %p65
      %p67 = scmp.ne.s32.totalorder %s55, %s56
      %p68 = scmp.eq.s32.totalorder %s25, 1
      %p69 = por %p67, %p68
      %p71 = scmp.ne.s32.totalorder %s56, %s70
      %p72 = scmp.eq.s32.totalorder %s25, 0
      %p73 = por %p71, %p72
      %s75 = sadd.s32 %s74, 1
      %p78 = scmp.eq.s32.totalorder %s19, 1
      %p79 = scmp.ne.s32.totalorder %s74, %s76
      %p80 = scmp.eq.s32.totalorder %s19, 0
      %p81 = por %p79, %p80
      %p82 = scmp.ne.s32.totalorder %s74, %s76
      %p83 = scmp.eq.s32.totalorder %s24, 1
      %p84 = por %p82, %p83
      %p85 = scmp.ne.s32.totalorder %s76, %s77
      %p86 = scmp.eq.s32.totalorder %s24, 0
      %p87 = por %p85, %p86
      %p88 = scmp.ne.s32.totalorder %s76, %s77
      %p89 = scmp.eq.s32.totalorder %s25, 1
      %p90 = por %p88, %p89
      %p92 = scmp.ne.s32.totalorder %s77, %s91
      %p93 = scmp.eq.s32.totalorder %s25, 0
      %p94 = por %p92, %p93
      %s96 = sadd.s32 %s95, 1
      %p99 = scmp.eq.s32.totalorder %s19, 1
      %p100 = scmp.ne.s32.totalorder %s95, %s97
      %p101 = scmp.eq.s32.totalorder %s19, 0
      %p102 = por %p100, %p101
      %p103 = scmp.ne.s32.totalorder %s95, %s97
      %p104 = scmp.eq.s32.totalorder %s24, 1
      %p105 = por %p103, %p104
      %p106 = scmp.ne.s32.totalorder %s97, %s98
      %p107 = scmp.eq.s32.totalorder %s24, 0
      %p108 = por %p106, %p107
      %p109 = scmp.ne.s32.totalorder %s97, %s98
      %p110 = scmp.eq.s32.totalorder %s25, 1
      %p111 = por %p109, %p110
      %p113 = scmp.ne.s32.totalorder %s98, %s112
      %p114 = scmp.eq.s32.totalorder %s25, 0
      %p115 = por %p113, %p114
      %s117 = sadd.s32 %s116, 1
      %p120 = scmp.eq.s32.totalorder %s19, 1
      %p121 = scmp.ne.s32.totalorder %s116, %s118
      %p122 = scmp.eq.s32.totalorder %s19, 0
      %p123 = por %p121, %p122
      %p124 = scmp.ne.s32.totalorder %s116, %s118
      %p125 = scmp.eq.s32.totalorder %s24, 1
      %p126 = por %p124, %p125
      %p127 = scmp.ne.s32.totalorder %s118, %s119
      %p128 = scmp.eq.s32.totalorder %s24, 0
      %p129 = por %p127, %p128
      %p130 = scmp.ne.s32.totalorder %s118, %s119
      %p131 = scmp.eq.s32.totalorder %s25, 1
      %p132 = por %p130, %p131
      %p134 = scmp.ne.s32.totalorder %s119, %s133
      %p135 = scmp.eq.s32.totalorder %s25, 0
      %p136 = por %p134, %p135
      %s137 = ssub.s32 %s19, %s26
      %p138 = scmp.eq.s32.totalorder %s137, 0
      %s140 = sadd.s32 %s139, 1
      %s141 = scalar_select %p138, %s139, %s140
      %p144 = pneg %p138
      %p145 = scmp.eq.s32.totalorder %s19, 1
      %p146 = por %p144, %p145
      %p147 = scmp.ne.s32.totalorder %s139, %s142
      %p148 = scmp.eq.s32.totalorder %s19, 0
      %p149 = por %p147, %p148
      %p150 = scmp.ne.s32.totalorder %s139, %s142
      %p151 = scmp.eq.s32.totalorder %s24, 1
      %p152 = por %p150, %p151
      %p153 = scmp.ne.s32.totalorder %s142, %s143
      %p154 = scmp.eq.s32.totalorder %s24, 0
      %p155 = por %p153, %p154
      %p156 = scmp.ne.s32.totalorder %s142, %s143
      %p157 = scmp.eq.s32.totalorder %s25, 1
      %p158 = por %p156, %p157
      %p160 = scmp.ne.s32.totalorder %s143, %s159
      %p161 = scmp.eq.s32.totalorder %s25, 0
      %p162 = por %p160, %p161
      %p163 = scmp.le.s32.totalorder 1, %s19
      %p164 = scmp.lt.s32.totalorder %s19, 3
      %p165 = pnand %p163, %p164
      %p166 = pneg %p165
      // Predicated region
      $region9: #{tpu_custom_call.1} parent=5 // pred_check
        _
      $region10: #{tpu_custom_call.1} parent=5 // pred_check_branch
        %168 = sbr.rel (%p165) target = $region12
      $region11: #{tpu_custom_call.1} parent=5 // pred_region
        %s169 = ssub.s32 %s19, 1
        // Predicated region
        $region13: #{tpu_custom_call.1} parent=11 // pred_check
          %p170 = pneg %p66
        $region14: #{tpu_custom_call.1} parent=11 // pred_check_branch
          %172 = sbr.rel (%p170) target = $region16
        $region15: #{tpu_custom_call.1} parent=11 // pred_region
          %s174 = ssub.s32 3072, 3072
          %175 = vsyncadd [#allocation6], %s174
          %s176 = sshll.u32 [#allocation5], 4
          %s177 = int_to_ptr.vmem [resolvable:$true] %s176
          %182 = dma.hbm_to_vmem [thread:$0]  %s1, 3072, %s177, [#allocation6], 192, 192, 12
        $region16: #{tpu_custom_call.1} parent=11 // pred_fallthru
          _
        // Predicated region
        $region17: #{tpu_custom_call.1} parent=11 // pred_check
          %p183 = pneg %p87
        $region18: #{tpu_custom_call.1} parent=11 // pred_check_branch
          %185 = sbr.rel (%p183) target = $region20
        $region19: #{tpu_custom_call.1} parent=11 // pred_region
          %s187 = ssub.s32 1024, 1024
          %188 = vsyncadd [#allocation6], %s187
          %s189 = sshll.u32 [#allocation7], 4
          %s190 = int_to_ptr.vmem [resolvable:$true] %s189
          %195 = dma.hbm_to_vmem [thread:$0]  %s2, 1024, %s190, [#allocation6], 64, 64, 4
        $region20: #{tpu_custom_call.1} parent=11 // pred_fallthru
          _
        // Predicated region
        $region21: #{tpu_custom_call.1} parent=11 // pred_check
          %p196 = pneg %p108
        $region22: #{tpu_custom_call.1} parent=11 // pred_check_branch
          %198 = sbr.rel (%p196) target = $region24
        $region23: #{tpu_custom_call.1} parent=11 // pred_region
          _
        $region24: #{tpu_custom_call.1} parent=11 // pred_fallthru
          _
        // Predicated region
        $region25: #{tpu_custom_call.1} parent=11 // pred_check
          %p199 = pneg %p129
        $region26: #{tpu_custom_call.1} parent=11 // pred_check_branch
          %201 = sbr.rel (%p199) target = $region28
        $region27: #{tpu_custom_call.1} parent=11 // pred_region
          %s203 = ssub.s32 1024, 1024
          %204 = vsyncadd [#allocation9], %s203
          %s205 = sshll.u32 [#allocation8], 4
          %s206 = int_to_ptr.vmem [resolvable:$true] %s205
          %211 = dma.hbm_to_vmem [thread:$0]  %s4, 1024, %s206, [#allocation9], 64, 64, 4
        $region28: #{tpu_custom_call.1} parent=11 // pred_fallthru
          _
      $region12: #{tpu_custom_call.1} parent=5 // pred_fallthru
        _
      %p212 = scmp.lt.s32.totalorder %s19, 2
      // Predicated region
      $region29: #{tpu_custom_call.1} parent=5 // pred_check
        %p213 = pneg %p212
      $region30: #{tpu_custom_call.1} parent=5 // pred_check_branch
        %215 = sbr.rel (%p213) target = $region32
      $region31: #{tpu_custom_call.1} parent=5 // pred_region
        // Predicated region
        $region33: #{tpu_custom_call.1} parent=31 // pred_check
          %p216 = pneg %p39
        $region34: #{tpu_custom_call.1} parent=31 // pred_check_branch
          %218 = sbr.rel (%p216) target = $region36
        $region35: #{tpu_custom_call.1} parent=31 // pred_region
          %s219 = sand.u32 %s29, 1
          %s220 = scalar_lea.sflag [#allocation3], %s219
          %s221 = sand.u32 %s29, 1
          %s222 = smul.addr %s221, 16
          %s223 = scalar_lea.vmem [#allocation2], %s222
          %s225 = ssub.s32 256, 256
          %226 = vsyncadd %s220, %s225
          %s227 = smul.addr %s19, 2
          %s228 = smul.addr %s227, 128
          %s229 = scalar_lea.hbm %s0, %s228
          %s230 = sshll.u32 %s223, 4
          %s231 = int_to_ptr.vmem [resolvable:$true] %s230
          %236 = dma.hbm_to_vmem [thread:$0]  %s229, 256, %s231, %s220, 128, 128, 8
        $region36: #{tpu_custom_call.1} parent=31 // pred_fallthru
          _
      $region32: #{tpu_custom_call.1} parent=5 // pred_fallthru
        _
      %p237 = scmp.le.s32.totalorder 1, %s19
      %p238 = scmp.lt.s32.totalorder %s19, 3
      %p239 = pnand %p237, %p238
      %p240 = pneg %p239
      // Predicated region
      $region37: #{tpu_custom_call.1} parent=5 // pred_check
        _
      $region38: #{tpu_custom_call.1} parent=5 // pred_check_branch
        %242 = sbr.rel (%p239) target = $region40
      $region39: #{tpu_custom_call.1} parent=5 // pred_region
        %s243 = ssub.s32 %s19, 1
        %s244 = sand.u32 %s32, 1
        %s245 = scalar_lea.sflag [#allocation3], %s244
        %s246 = sand.u32 %s32, 1
        %s247 = smul.addr %s246, 16
        %s248 = scalar_lea.vmem [#allocation2], %s247
        // Predicated region
        $region41: #{tpu_custom_call.1} parent=39 // pred_check
          %p249 = pneg %p45
        $region42: #{tpu_custom_call.1} parent=39 // pred_check_branch
          %251 = sbr.rel (%p249) target = $region44
        $region43: #{tpu_custom_call.1} parent=39 // pred_region
          %252 = dma.done %s245, 256
        $region44: #{tpu_custom_call.1} parent=39 // pred_fallthru
          _
        // Predicated region
        $region45: #{tpu_custom_call.1} parent=39 // pred_check
          %p253 = pneg %p66
        $region46: #{tpu_custom_call.1} parent=39 // pred_check_branch
          %255 = sbr.rel (%p253) target = $region48
        $region47: #{tpu_custom_call.1} parent=39 // pred_region
          %256 = dma.done [#allocation6], 3072
        $region48: #{tpu_custom_call.1} parent=39 // pred_fallthru
          _
        // Predicated region
        $region49: #{tpu_custom_call.1} parent=39 // pred_check
          %p257 = pneg %p87
        $region50: #{tpu_custom_call.1} parent=39 // pred_check_branch
          %259 = sbr.rel (%p257) target = $region52
        $region51: #{tpu_custom_call.1} parent=39 // pred_region
          %260 = dma.done [#allocation6], 1024
        $region52: #{tpu_custom_call.1} parent=39 // pred_fallthru
          _
        // Predicated region
        $region53: #{tpu_custom_call.1} parent=39 // pred_check
          %p261 = pneg %p129
        $region54: #{tpu_custom_call.1} parent=39 // pred_check_branch
          %263 = sbr.rel (%p261) target = $region56
        $region55: #{tpu_custom_call.1} parent=39 // pred_region
          %264 = dma.done [#allocation9], 1024
        $region56: #{tpu_custom_call.1} parent=39 // pred_fallthru
          _
        %s265 = sand.u32 %s32, 1
        %s266 = scalar_lea.sflag [#allocation3], %s265
        %s267 = sand.u32 %s32, 1
        %s268 = smul.addr %s267, 16
        %s269 = scalar_lea.vmem [#allocation2], %s268
        %p270 = pneg %p45
        %p271 = pneg %p42
        %p272 = pneg %p66
        %p273 = pneg %p63
        %p274 = pneg %p87
        %p275 = pneg %p84
        %p276 = pneg %p108
        %p277 = pneg %p105
        %p278 = pneg %p129
        %p279 = pneg %p126
        %p280 = pneg %p155
        %p281 = pneg %p152
        %s282 = sand.u32 %s142, 1
        %s283 = scalar_lea.sflag [#allocation4], %s282
        %s284 = sand.u32 %s142, 1
        %s285 = smul.addr %s284, 16
        %s286 = scalar_lea.vmem [#allocation10], %s285
        %v288 = vld [vmem:[%s248] sm:$0xff]
        %v289 = vld [vmem:[%s248 + $0x8] sm:$0xff]
        %v290 = vpack.c.bf16 %v289, %v288
        %v291 = vld [vmem:[#allocation5] sm:$0xff]
        %v292 = vld [vmem:[#allocation5 + $0x8] sm:$0xf]
        %v293 = vld [vmem:[#allocation5 + $0xc] sm:$0xff]
        %v294 = vld [vmem:[#allocation5 + $0x14] sm:$0xf]
        %v295 = vld [vmem:[#allocation5 + $0x18] sm:$0xff]
        %v296 = vld [vmem:[#allocation5 + $0x20] sm:$0xf]
        %v297 = vld [vmem:[#allocation5 + $0x24] sm:$0xff]
        %v298 = vld [vmem:[#allocation5 + $0x2c] sm:$0xf]
        %v299 = vld [vmem:[#allocation5 + $0x30] sm:$0xff]
        %v300 = vld [vmem:[#allocation5 + $0x38] sm:$0xf]
        %v301 = vld [vmem:[#allocation5 + $0x3c] sm:$0xff]
        %v302 = vld [vmem:[#allocation5 + $0x44] sm:$0xf]
        %v303 = vld [vmem:[#allocation5 + $0x48] sm:$0xff]
        %v304 = vld [vmem:[#allocation5 + $0x50] sm:$0xf]
        %v305 = vld [vmem:[#allocation5 + $0x54] sm:$0xff]
        %v306 = vld [vmem:[#allocation5 + $0x5c] sm:$0xf]
        %v307 = vld [vmem:[#allocation5 + $0x60] sm:$0xff]
        %v308 = vld [vmem:[#allocation5 + $0x68] sm:$0xf]
        %v309 = vld [vmem:[#allocation5 + $0x6c] sm:$0xff]
        %v310 = vld [vmem:[#allocation5 + $0x74] sm:$0xf]
        %v311 = vld [vmem:[#allocation5 + $0x78] sm:$0xff]
        %v312 = vld [vmem:[#allocation5 + $0x80] sm:$0xf]
        %v313 = vld [vmem:[#allocation5 + $0x84] sm:$0xff]
        %v314 = vld [vmem:[#allocation5 + $0x8c] sm:$0xf]
        %v315 = vld [vmem:[#allocation5 + $0x90] sm:$0xff]
        %v316 = vld [vmem:[#allocation5 + $0x98] sm:$0xf]
        %v317 = vld [vmem:[#allocation5 + $0x9c] sm:$0xff]
        %v318 = vld [vmem:[#allocation5 + $0xa4] sm:$0xf]
        %v319 = vld [vmem:[#allocation5 + $0xa8] sm:$0xff]
        %v320 = vld [vmem:[#allocation5 + $0xb0] sm:$0xf]
        %v321 = vld [vmem:[#allocation5 + $0xb4] sm:$0xff]
        %v322 = vld [vmem:[#allocation5 + $0xbc] sm:$0xf]
        %v355 = vunpack.c.l.b16 %v291
        %v356 = vunpack.c.h.b16 %v291
        %v357 = vunpack.c.l.b16 %v292
        %v358 = vunpack.c.l.b16 %v293
        %v359 = vunpack.c.h.b16 %v293
        %v360 = vunpack.c.l.b16 %v294
        %v361 = vunpack.c.l.b16 %v295
        %v362 = vunpack.c.h.b16 %v295
        %v363 = vunpack.c.l.b16 %v296
        %v364 = vunpack.c.l.b16 %v297
        %v365 = vunpack.c.h.b16 %v297
        %v366 = vunpack.c.l.b16 %v298
        %v367 = vunpack.c.l.b16 %v299
        %v368 = vunpack.c.h.b16 %v299
        %v369 = vunpack.c.l.b16 %v300
        %v370 = vunpack.c.l.b16 %v301
        %v371 = vunpack.c.h.b16 %v301
        %v372 = vunpack.c.l.b16 %v302
        %v373 = vunpack.c.l.b16 %v303
        %v374 = vunpack.c.h.b16 %v303
        %v375 = vunpack.c.l.b16 %v304
        %v376 = vunpack.c.l.b16 %v305
        %v377 = vunpack.c.h.b16 %v305
        %v378 = vunpack.c.l.b16 %v306
        %v379 = vunpack.c.l.b16 %v307
        %v380 = vunpack.c.h.b16 %v307
        %v381 = vunpack.c.l.b16 %v308
        %v382 = vunpack.c.l.b16 %v309
        %v383 = vunpack.c.h.b16 %v309
        %v384 = vunpack.c.l.b16 %v310
        %v385 = vunpack.c.l.b16 %v311
        %v386 = vunpack.c.h.b16 %v311
        %v387 = vunpack.c.l.b16 %v312
        %v388 = vunpack.c.l.b16 %v313
        %v389 = vunpack.c.h.b16 %v313
        %v390 = vunpack.c.l.b16 %v314
        %v391 = vunpack.c.l.b16 %v315
        %v392 = vunpack.c.h.b16 %v315
        %v393 = vunpack.c.l.b16 %v316
        %v394 = vunpack.c.l.b16 %v317
        %v395 = vunpack.c.h.b16 %v317
        %v396 = vunpack.c.l.b16 %v318
        %v397 = vunpack.c.l.b16 %v319
        %v398 = vunpack.c.h.b16 %v319
        %v399 = vunpack.c.l.b16 %v320
        %v400 = vunpack.c.l.b16 %v321
        %v401 = vunpack.c.h.b16 %v321
        %v402 = vunpack.c.l.b16 %v322
        %v403 = vpack.c.b16 %v358, %v355
        %v404 = vpack.c.b16 %v359, %v356
        %v405 = vpack.c.b16 %v360, %v357
        %v406 = vpack.c.b16 %v364, %v361
        %v407 = vpack.c.b16 %v365, %v362
        %v408 = vpack.c.b16 %v366, %v363
        %v409 = vpack.c.b16 %v370, %v367
        %v410 = vpack.c.b16 %v371, %v368
        %v411 = vpack.c.b16 %v372, %v369
        %v412 = vpack.c.b16 %v376, %v373
        %v413 = vpack.c.b16 %v377, %v374
        %v414 = vpack.c.b16 %v378, %v375
        %v415 = vpack.c.b16 %v382, %v379
        %v416 = vpack.c.b16 %v383, %v380
        %v417 = vpack.c.b16 %v384, %v381
        %v418 = vpack.c.b16 %v388, %v385
        %v419 = vpack.c.b16 %v389, %v386
        %v420 = vpack.c.b16 %v390, %v387
        %v421 = vpack.c.b16 %v394, %v391
        %v422 = vpack.c.b16 %v395, %v392
        %v423 = vpack.c.b16 %v396, %v393
        %v424 = vpack.c.b16 %v400, %v397
        %v425 = vpack.c.b16 %v401, %v398
        %v426 = vpack.c.b16 %v402, %v399
        %451 = vmatprep.subr.bf16.mxu0 %v404
        %452 = vmatpush1.bf16.msra.mxu0 %v403
        %453 = vmatprep.subr.bf16.mxu0 %v407
        %454 = vmatpush1.bf16.msra.mxu0 %v406
        %455 = vmatprep.subr.bf16.mxu0 %v410
        %456 = vmatpush1.bf16.msra.mxu0 %v409
        %457 = vmatprep.subr.bf16.mxu0 %v413
        %458 = vmatpush1.bf16.msra.mxu0 %v412
        %459 = vmatprep.subr.bf16.mxu0 %v416
        %460 = vmatpush1.bf16.msra.mxu0 %v415
        %461 = vmatprep.subr.bf16.mxu0 %v419
        %462 = vmatpush1.bf16.msra.mxu0 %v418
        %463 = vmatprep.subr.bf16.mxu0 %v422
        %464 = vmatpush1.bf16.msra.mxu0 %v421
        %465 = vmatprep.subr.bf16.mxu0 %v425
        %466 = vmatpush1.bf16.msra.mxu0 %v424
        %467 = vmatprep.subr.bf16.mxu0 0
        %468 = vmatpush1.bf16.msra.mxu0 0
        %469 = vmatprep.subr.bf16.mxu0 0
        %470 = vmatpush1.bf16.msra.mxu0 0
        %471 = vmatprep.subr.bf16.mxu0 0
        %472 = vmatpush1.bf16.msra.mxu0 0
        %473 = vmatprep.subr.bf16.mxu0 0
        %474 = vmatpush1.bf16.msra.mxu0 0
        %475 = vmatprep.subr.bf16.mxu0 0
        %476 = vmatpush1.bf16.msra.mxu0 0
        %477 = vmatprep.subr.bf16.mxu0 0
        %478 = vmatpush1.bf16.msra.mxu0 0
        %479 = vmatprep.subr.bf16.mxu0 0
        %480 = vmatpush1.bf16.msra.mxu0 0
        %481 = vmatprep.subr.bf16.mxu0 0
        %482 = vmatpush1.bf16.msra.mxu0 0
        %483 = vmatprep.mubr.bf16.mxu0 0
        %484 = vmatmul.mubr.bf16.gmra.mrb[0].mxu0 %v290
        %v485 = vpop.f32.mrb[0].mxu0
        %v486 = vadd.f32 0.0, %v485
        %v487 = vpop.f32.mrb[0].mxu0
        %v488 = vadd.f32 0.0, %v487
        %v489 = vpop.f32.mrb[0].mxu0
        %v490 = vadd.f32 0.0, %v489
        %v491 = vpop.f32.mrb[0].mxu0
        %v492 = vadd.f32 0.0, %v491
        %493 = vdwg.mxu0
        %494 = vmatprep.subr.bf16.mxu0 0
        %495 = vmatpush1.bf16.msra.mxu0 %v405
        %496 = vmatprep.subr.bf16.mxu0 0
        %497 = vmatpush1.bf16.msra.mxu0 %v408
        %498 = vmatprep.subr.bf16.mxu0 0
        %499 = vmatpush1.bf16.msra.mxu0 %v411
        %500 = vmatprep.subr.bf16.mxu0 0
        %501 = vmatpush1.bf16.msra.mxu0 %v414
        %502 = vmatprep.subr.bf16.mxu0 0
        %503 = vmatpush1.bf16.msra.mxu0 %v417
        %504 = vmatprep.subr.bf16.mxu0 0
        %505 = vmatpush1.bf16.msra.mxu0 %v420
        %506 = vmatprep.subr.bf16.mxu0 0
        %507 = vmatpush1.bf16.msra.mxu0 %v423
        %508 = vmatprep.subr.bf16.mxu0 0
        %509 = vmatpush1.bf16.msra.mxu0 %v426
        %510 = vmatprep.subr.bf16.mxu0 0
        %511 = vmatpush1.bf16.msra.mxu0 0
        %512 = vmatprep.subr.bf16.mxu0 0
        %513 = vmatpush1.bf16.msra.mxu0 0
        %514 = vmatprep.subr.bf16.mxu0 0
        %515 = vmatpush1.bf16.msra.mxu0 0
        %516 = vmatprep.subr.bf16.mxu0 0
        %517 = vmatpush1.bf16.msra.mxu0 0
        %518 = vmatprep.subr.bf16.mxu0 0
        %519 = vmatpush1.bf16.msra.mxu0 0
        %520 = vmatprep.subr.bf16.mxu0 0
        %521 = vmatpush1.bf16.msra.mxu0 0
        %522 = vmatprep.subr.bf16.mxu0 0
        %523 = vmatpush1.bf16.msra.mxu0 0
        %524 = vmatprep.subr.bf16.mxu0 0
        %525 = vmatpush1.bf16.msra.mxu0 0
        %526 = vmatprep.mubr.bf16.mxu0 0
        %527 = vmatmul.mubr.bf16.gmra.mrb[0].mxu0 %v290
        %v528 = vpop.f32.mrb[0].mxu0
        %v529 = vadd.f32 0.0, %v528
        %v530 = vpop.f32.mrb[0].mxu0
        %v531 = vpop.f32.mrb[0].mxu0
        %v532 = vadd.f32 0.0, %v531
        %v533 = vpop.f32.mrb[0].mxu0
        %534 = vdwg.mxu0
        %v535 = vmul.f32 %v486, 0.5
        %v536 = vmul.f32 %v490, 0.5
        %v537 = vpack.c.bf16 %v536, %v535
        %v538 = vpack.c.bf16 %v492, %v488
        %v539 = vpack.c.bf16 %v532, %v529
        %v540 = vld [vmem:[#allocation8] sm:$0xf]
        %v541 = vld [vmem:[#allocation8 + $0x4] sm:$0xf]
        %v542 = vld [vmem:[#allocation8 + $0x8] sm:$0xf]
        %v543 = vld [vmem:[#allocation8 + $0xc] sm:$0xf]
        %v544 = vld [vmem:[#allocation8 + $0x10] sm:$0xf]
        %v545 = vld [vmem:[#allocation8 + $0x14] sm:$0xf]
        %v546 = vld [vmem:[#allocation8 + $0x18] sm:$0xf]
        %v547 = vld [vmem:[#allocation8 + $0x1c] sm:$0xf]
        %v548 = vld [vmem:[#allocation8 + $0x20] sm:$0xf]
        %v549 = vld [vmem:[#allocation8 + $0x24] sm:$0xf]
        %v550 = vld [vmem:[#allocation8 + $0x28] sm:$0xf]
        %v551 = vld [vmem:[#allocation8 + $0x2c] sm:$0xf]
        %v552 = vld [vmem:[#allocation8 + $0x30] sm:$0xf]
        %v553 = vld [vmem:[#allocation8 + $0x34] sm:$0xf]
        %v554 = vld [vmem:[#allocation8 + $0x38] sm:$0xf]
        %v555 = vld [vmem:[#allocation8 + $0x3c] sm:$0xf]
        %v572 = vunpack.c.l.b16 %v540
        %v573 = vunpack.c.l.b16 %v541
        %v574 = vunpack.c.l.b16 %v542
        %v575 = vunpack.c.l.b16 %v543
        %v576 = vunpack.c.l.b16 %v544
        %v577 = vunpack.c.l.b16 %v545
        %v578 = vunpack.c.l.b16 %v546
        %v579 = vunpack.c.l.b16 %v547
        %v580 = vunpack.c.l.b16 %v548
        %v581 = vunpack.c.l.b16 %v549
        %v582 = vunpack.c.l.b16 %v550
        %v583 = vunpack.c.l.b16 %v551
        %v584 = vunpack.c.l.b16 %v552
        %v585 = vunpack.c.l.b16 %v553
        %v586 = vunpack.c.l.b16 %v554
        %v587 = vunpack.c.l.b16 %v555
        %v588 = vpack.c.b16 %v573, %v572
        %v589 = vpack.c.b16 %v575, %v574
        %v590 = vpack.c.b16 %v577, %v576
        %v591 = vpack.c.b16 %v579, %v578
        %v592 = vpack.c.b16 %v581, %v580
        %v593 = vpack.c.b16 %v583, %v582
        %v594 = vpack.c.b16 %v585, %v584
        %v595 = vpack.c.b16 %v587, %v586
        %v604 = vmul.bf16 %v538, %v588
        %v605 = vmul.bf16 %v538, %v589
        %v606 = vmul.bf16 %v538, %v590
        %v607 = vmul.bf16 %v538, %v591
        %v608 = vmul.bf16 %v538, %v592
        %v609 = vmul.bf16 %v538, %v593
        %v610 = vmul.bf16 %v538, %v594
        %v611 = vmul.bf16 %v538, %v595
        %v612 = vmul.bf16 %v539, %v588
        %v613 = vmul.bf16 %v539, %v589
        %v614 = vmul.bf16 %v539, %v590
        %v615 = vmul.bf16 %v539, %v591
        %v616 = vmul.bf16 %v539, %v592
        %v617 = vmul.bf16 %v539, %v593
        %v618 = vmul.bf16 %v539, %v594
        %v619 = vmul.bf16 %v539, %v595
        %620 = vmatprep.subr.bf16.mxu0 0
        %621 = vmatpush1.bf16.xpose.msra.mxu0 %v604
        %622 = vmatprep.subr.bf16.mxu0 0
        %623 = vmatpush1.bf16.xpose.msra.mxu0 %v605
        %624 = vmatprep.subr.bf16.mxu0 0
        %625 = vmatpush1.bf16.xpose.msra.mxu0 %v606
        %626 = vmatprep.subr.bf16.mxu0 0
        %627 = vmatpush1.bf16.xpose.msra.mxu0 %v607
        %628 = vmatprep.subr.bf16.mxu0 0
        %629 = vmatpush1.bf16.xpose.msra.mxu0 %v608
        %630 = vmatprep.subr.bf16.mxu0 0
        %631 = vmatpush1.bf16.xpose.msra.mxu0 %v609
        %632 = vmatprep.subr.bf16.mxu0 0
        %633 = vmatpush1.bf16.xpose.msra.mxu0 %v610
        %634 = vmatprep.subr.bf16.mxu0 0
        %635 = vmatpush1.bf16.xpose.msra.mxu0 %v611
        %636 = vmatprep.subr.bf16.mxu0 0
        %637 = vmatpush1.bf16.xpose.msra.mxu0 0
        %638 = vmatprep.subr.bf16.mxu0 0
        %639 = vmatpush1.bf16.xpose.msra.mxu0 0
        %640 = vmatprep.subr.bf16.mxu0 0
        %641 = vmatpush1.bf16.xpose.msra.mxu0 0
        %642 = vmatprep.subr.bf16.mxu0 0
        %643 = vmatpush1.bf16.xpose.msra.mxu0 0
        %644 = vmatprep.subr.bf16.mxu0 0
        %645 = vmatpush1.bf16.xpose.msra.mxu0 0
        %646 = vmatprep.subr.bf16.mxu0 0
        %647 = vmatpush1.bf16.xpose.msra.mxu0 0
        %648 = vmatprep.subr.bf16.mxu0 0
        %649 = vmatpush1.bf16.xpose.msra.mxu0 0
        %650 = vmatprep.subr.bf16.mxu0 0
        %651 = vmatpush1.bf16.xpose.msra.mxu0 0
        %652 = vmatprep.mubr.bf16.mxu0 0
        %653 = vmatmul.mubr.bf16.gmra.mrb[0].mxu0 %v537
        %v654 = vpop.f32.mrb[0].mxu0
        %v655 = vadd.f32 0.0, %v654
        %v656 = vpop.f32.mrb[0].mxu0
        %v657 = vpop.f32.mrb[0].mxu0
        %v658 = vadd.f32 0.0, %v657
        %v659 = vpop.f32.mrb[0].mxu0
        %660 = vdwg.mxu0
        %661 = vmax.xlane.f32.xlu0 %v655
        %v662 = vpop.xlane.xlu0 %661
        %663 = vmax.xlane.f32.xlu0 %v658
        %v664 = vpop.xlane.xlu0 %663
        %v665 = vsub.f32 %v655, %v662
        %v666 = vsub.f32 %v658, %v664
        %v667 = vmul.f32 %v665, 1.442695
        %v668 = vpow.pop %v667
        %v669 = vmul.f32 %v666, 1.442695
        %v670 = vpow.pop %v669
        %v671 = vpack.c.bf16 %v670, %v668
        %672 = vmatprep.subr.bf16.mxu0 0
        %673 = vmatpush1.bf16.msra.mxu0 %v612
        %674 = vmatprep.subr.bf16.mxu0 0
        %675 = vmatpush1.bf16.msra.mxu0 %v613
        %676 = vmatprep.subr.bf16.mxu0 0
        %677 = vmatpush1.bf16.msra.mxu0 %v614
        %678 = vmatprep.subr.bf16.mxu0 0
        %679 = vmatpush1.bf16.msra.mxu0 %v615
        %680 = vmatprep.subr.bf16.mxu0 0
        %681 = vmatpush1.bf16.msra.mxu0 %v616
        %682 = vmatprep.subr.bf16.mxu0 0
        %683 = vmatpush1.bf16.msra.mxu0 %v617
        %684 = vmatprep.subr.bf16.mxu0 0
        %685 = vmatpush1.bf16.msra.mxu0 %v618
        %686 = vmatprep.subr.bf16.mxu0 0
        %687 = vmatpush1.bf16.msra.mxu0 %v619
        %688 = vmatprep.subr.bf16.mxu0 0
        %689 = vmatpush1.bf16.msra.mxu0 0
        %690 = vmatprep.subr.bf16.mxu0 0
        %691 = vmatpush1.bf16.msra.mxu0 0
        %692 = vmatprep.subr.bf16.mxu0 0
        %693 = vmatpush1.bf16.msra.mxu0 0
        %694 = vmatprep.subr.bf16.mxu0 0
        %695 = vmatpush1.bf16.msra.mxu0 0
        %696 = vmatprep.subr.bf16.mxu0 0
        %697 = vmatpush1.bf16.msra.mxu0 0
        %698 = vmatprep.subr.bf16.mxu0 0
        %699 = vmatpush1.bf16.msra.mxu0 0
        %700 = vmatprep.subr.bf16.mxu0 0
        %701 = vmatpush1.bf16.msra.mxu0 0
        %702 = vmatprep.subr.bf16.mxu0 0
        %703 = vmatpush1.bf16.msra.mxu0 0
        %704 = vmatprep.mubr.bf16.mxu0 0
        %705 = vmatmul.mubr.bf16.gmra.mrb[0].mxu0 %v671
        %v706 = vpop.f32.mrb[0].mxu0
        %v707 = vadd.f32 0.0, %v706
        %v708 = vpop.f32.mrb[0].mxu0
        %v709 = vpop.f32.mrb[0].mxu0
        %v710 = vadd.f32 0.0, %v709
        %v711 = vpop.f32.mrb[0].mxu0
        %712 = vdwg.mxu0
        %713 = vmatprep.subr.bf16.mxu0 0
        %714 = vmatpush1.bf16.msra.mxu0 %v588
        %715 = vmatprep.subr.bf16.mxu0 0
        %716 = vmatpush1.bf16.msra.mxu0 %v589
        %717 = vmatprep.subr.bf16.mxu0 0
        %718 = vmatpush1.bf16.msra.mxu0 %v590
        %719 = vmatprep.subr.bf16.mxu0 0
        %720 = vmatpush1.bf16.msra.mxu0 %v591
        %721 = vmatprep.subr.bf16.mxu0 0
        %722 = vmatpush1.bf16.msra.mxu0 %v592
        %723 = vmatprep.subr.bf16.mxu0 0
        %724 = vmatpush1.bf16.msra.mxu0 %v593
        %725 = vmatprep.subr.bf16.mxu0 0
        %726 = vmatpush1.bf16.msra.mxu0 %v594
        %727 = vmatprep.subr.bf16.mxu0 0
        %728 = vmatpush1.bf16.msra.mxu0 %v595
        %729 = vmatprep.subr.bf16.mxu0 0
        %730 = vmatpush1.bf16.msra.mxu0 0
        %731 = vmatprep.subr.bf16.mxu0 0
        %732 = vmatpush1.bf16.msra.mxu0 0
        %733 = vmatprep.subr.bf16.mxu0 0
        %734 = vmatpush1.bf16.msra.mxu0 0
        %735 = vmatprep.subr.bf16.mxu0 0
        %736 = vmatpush1.bf16.msra.mxu0 0
        %737 = vmatprep.subr.bf16.mxu0 0
        %738 = vmatpush1.bf16.msra.mxu0 0
        %739 = vmatprep.subr.bf16.mxu0 0
        %740 = vmatpush1.bf16.msra.mxu0 0
        %741 = vmatprep.subr.bf16.mxu0 0
        %742 = vmatpush1.bf16.msra.mxu0 0
        %743 = vmatprep.subr.bf16.mxu0 0
        %744 = vmatpush1.bf16.msra.mxu0 0
        %745 = vmatprep.mubr.bf16.mxu0 0
        %746 = vmatmul.mubr.bf16.gmra.mrb[0].mxu0 %v671
        %v747 = vpop.f32.mrb[0].mxu0
        %v748 = vadd.f32 0.0, %v747
        %v749 = vpop.f32.mrb[0].mxu0
        %v750 = vpop.f32.mrb[0].mxu0
        %v751 = vadd.f32 0.0, %v750
        %v752 = vpop.f32.mrb[0].mxu0
        %753 = vdwg.mxu0
        %v754 = vrcp.pop %v748
        %v755 = vrcp.pop %v751
        %v756 = vmul.f32 %v707, %v754
        %v757 = vmul.f32 %v710, %v755
        %v758 = vpack.c.bf16 %v757, %v756
        %v759 = vld [vmem:[#allocation7] sm:$0xf]
        %v760 = vld [vmem:[#allocation7 + $0x4] sm:$0xf]
        %v761 = vld [vmem:[#allocation7 + $0x8] sm:$0xf]
        %v762 = vld [vmem:[#allocation7 + $0xc] sm:$0xf]
        %v763 = vld [vmem:[#allocation7 + $0x10] sm:$0xf]
        %v764 = vld [vmem:[#allocation7 + $0x14] sm:$0xf]
        %v765 = vld [vmem:[#allocation7 + $0x18] sm:$0xf]
        %v766 = vld [vmem:[#allocation7 + $0x1c] sm:$0xf]
        %v767 = vld [vmem:[#allocation7 + $0x20] sm:$0xf]
        %v768 = vld [vmem:[#allocation7 + $0x24] sm:$0xf]
        %v769 = vld [vmem:[#allocation7 + $0x28] sm:$0xf]
        %v770 = vld [vmem:[#allocation7 + $0x2c] sm:$0xf]
        %v771 = vld [vmem:[#allocation7 + $0x30] sm:$0xf]
        %v772 = vld [vmem:[#allocation7 + $0x34] sm:$0xf]
        %v773 = vld [vmem:[#allocation7 + $0x38] sm:$0xf]
        %v774 = vld [vmem:[#allocation7 + $0x3c] sm:$0xf]
        %v775 = vld [vmem:[%s3] sm:$0x1]
        %v777 = vlaneseq
        %v778 = vshrl.u32 %v777, 7
        %v779 = vsub.s32 0, %v778
        %v780 = vrot.slane %v775, %v779
        %v798 = vunpack.c.l.b16 %v759
        %v799 = vunpack.c.l.b16 %v760
        %v800 = vunpack.c.l.b16 %v761
        %v801 = vunpack.c.l.b16 %v762
        %v802 = vunpack.c.l.b16 %v763
        %v803 = vunpack.c.l.b16 %v764
        %v804 = vunpack.c.l.b16 %v765
        %v805 = vunpack.c.l.b16 %v766
        %v806 = vunpack.c.l.b16 %v767
        %v807 = vunpack.c.l.b16 %v768
        %v808 = vunpack.c.l.b16 %v769
        %v809 = vunpack.c.l.b16 %v770
        %v810 = vunpack.c.l.b16 %v771
        %v811 = vunpack.c.l.b16 %v772
        %v812 = vunpack.c.l.b16 %v773
        %v813 = vunpack.c.l.b16 %v774
        %v814 = vpack.c.b16 %v799, %v798
        %v815 = vpack.c.b16 %v801, %v800
        %v816 = vpack.c.b16 %v803, %v802
        %v817 = vpack.c.b16 %v805, %v804
        %v818 = vpack.c.b16 %v807, %v806
        %v819 = vpack.c.b16 %v809, %v808
        %v820 = vpack.c.b16 %v811, %v810
        %v821 = vpack.c.b16 %v813, %v812
        %830 = vmatprep.subr.bf16.mxu0 0
        %831 = vmatpush1.bf16.msra.mxu0 %v814
        %832 = vmatprep.subr.bf16.mxu0 0
        %833 = vmatpush1.bf16.msra.mxu0 %v815
        %834 = vmatprep.subr.bf16.mxu0 0
        %835 = vmatpush1.bf16.msra.mxu0 %v816
        %836 = vmatprep.subr.bf16.mxu0 0
        %837 = vmatpush1.bf16.msra.mxu0 %v817
        %838 = vmatprep.subr.bf16.mxu0 0
        %839 = vmatpush1.bf16.msra.mxu0 %v818
        %840 = vmatprep.subr.bf16.mxu0 0
        %841 = vmatpush1.bf16.msra.mxu0 %v819
        %842 = vmatprep.subr.bf16.mxu0 0
        %843 = vmatpush1.bf16.msra.mxu0 %v820
        %844 = vmatprep.subr.bf16.mxu0 0
        %845 = vmatpush1.bf16.msra.mxu0 %v821
        %846 = vmatprep.subr.bf16.mxu0 0
        %847 = vmatpush1.bf16.msra.mxu0 0
        %848 = vmatprep.subr.bf16.mxu0 0
        %849 = vmatpush1.bf16.msra.mxu0 0
        %850 = vmatprep.subr.bf16.mxu0 0
        %851 = vmatpush1.bf16.msra.mxu0 0
        %852 = vmatprep.subr.bf16.mxu0 0
        %853 = vmatpush1.bf16.msra.mxu0 0
        %854 = vmatprep.subr.bf16.mxu0 0
        %855 = vmatpush1.bf16.msra.mxu0 0
        %856 = vmatprep.subr.bf16.mxu0 0
        %857 = vmatpush1.bf16.msra.mxu0 0
        %858 = vmatprep.subr.bf16.mxu0 0
        %859 = vmatpush1.bf16.msra.mxu0 0
        %860 = vmatprep.subr.bf16.mxu0 0
        %861 = vmatpush1.bf16.msra.mxu0 0
        %862 = vmatprep.mubr.bf16.mxu0 0
        %863 = vmatmul.mubr.bf16.gmra.mrb[0].mxu0 %v758
        %v864 = vpop.f32.mrb[0].mxu0
        %v865 = vadd.f32 %v780, %v864
        %v866 = vpop.f32.mrb[0].mxu0
        %v867 = vpop.f32.mrb[0].mxu0
        %v868 = vadd.f32 %v780, %v867
        %v869 = vpop.f32.mrb[0].mxu0
        %870 = vdwg.mxu0
        %871 = vst [vmem:[%s286] sm:$0xff] %v865
        %872 = vst [vmem:[%s286 + $0x8] sm:$0xff] %v868
        %s873 = sand.u32 %s142, 1
        %s874 = scalar_lea.sflag [#allocation4], %s873
        %s875 = sand.u32 %s142, 1
        %s876 = smul.addr %s875, 16
        %s877 = scalar_lea.vmem [#allocation10], %s876
        // Predicated region
        $region57: #{tpu_custom_call.1} parent=39 // pred_check
          %p878 = pneg %p152
        $region58: #{tpu_custom_call.1} parent=39 // pred_check_branch
          %880 = sbr.rel (%p878) target = $region60
        $region59: #{tpu_custom_call.1} parent=39 // pred_region
          %s882 = ssub.s32 256, 256
          %883 = vsyncadd %s874, %s882
          %s884 = smul.addr %s24, 2
          %s885 = smul.addr %s884, 128
          %s886 = scalar_lea.hbm %s5, %s885
          %s887 = sshll.u32 %s877, 4
          %s888 = int_to_ptr.vmem [resolvable:$true] %s887
          %893 = dma.vmem_to_hbm [thread:$0]  %s888, 256, %s886, %s874, 128, 128, 8
        $region60: #{tpu_custom_call.1} parent=39 // pred_fallthru
          _
      $region40: #{tpu_custom_call.1} parent=5 // pred_fallthru
        _
      %p894 = scmp.le.s32.totalorder 2, %s19
      // Predicated region
      $region61: #{tpu_custom_call.1} parent=5 // pred_check
        %p895 = pneg %p894
      $region62: #{tpu_custom_call.1} parent=5 // pred_check_branch
        %897 = sbr.rel (%p895) target = $region64
      $region63: #{tpu_custom_call.1} parent=5 // pred_region
        %s898 = ssub.s32 %s19, 2
        // Predicated region
        $region65: #{tpu_custom_call.1} parent=63 // pred_check
          %p899 = pneg %p158
        $region66: #{tpu_custom_call.1} parent=63 // pred_check_branch
          %901 = sbr.rel (%p899) target = $region68
        $region67: #{tpu_custom_call.1} parent=63 // pred_region
          %s902 = sand.u32 %s143, 1
          %s903 = scalar_lea.sflag [#allocation4], %s902
          %s904 = sand.u32 %s143, 1
          %s905 = smul.addr %s904, 16
          %s906 = scalar_lea.vmem [#allocation10], %s905
          %907 = dma.done %s903, 256
        $region68: #{tpu_custom_call.1} parent=63 // pred_fallthru
          _
      $region64: #{tpu_custom_call.1} parent=5 // pred_fallthru
        _
    $region6: #{tpu_custom_call.1} parent=1 // loop_footer
      %s23 = sadd.s32 1, %s19
    $region7: #{tpu_custom_call.1} parent=1 // loop_footer_branch
      %18 = sbr.rel target = $region3
    $region8: #{tpu_custom_call.1} parent=1 // loop_exit
      _
    %908 = vsyncpa [#allocation3], 1
    %s909 = scalar_lea.sflag [#allocation3], 1
    %910 = vsyncpa %s909, 1
    %911 = vsyncpa [#allocation6], 1
    %912 = vsyncpa [#allocation9], 1
    %913 = vsyncpa [#allocation4], 1
    %s914 = scalar_lea.sflag [#allocation4], 1
    %915 = vsyncpa %s914, 1

</llo_original>
